<compile_context>
chip_gen: v6e
topology: v6e:2x2x1
jax: 0.10.0
libtpu: 0.0.40
codegen_flags: <defaults>
</compile_context>

<pallas_src>
import jax
import jax.numpy as jnp
from jax.experimental import pallas as pl
from jax.experimental.pallas import tpu as pltpu


def _round_up(x, m):
    return ((x + m - 1) // m) * m


def _critic_kernel(xt_ref, w1_ref, w2_ref, aux_ref, b3_ref, out_ref):
    # xt_ref : (S, TB)   state tile, pre-transposed -> lane-dense (batch on lanes)
    # w1_ref : (H, S)    PyTorch nn.Linear layout (out, in), resident in VMEM
    # w2_ref : (H, H)
    # aux_ref: (H, 3)    packed columns [b1 | b2 | w3]
    # b3_ref : (1, 1)    SMEM scalar (fc_value bias)
    # out_ref: (1, TB)   lane-dense output slab
    b1 = aux_ref[:, 0:1]
    b2 = aux_ref[:, 1:2]
    w3 = aux_ref[:, 2:3]

    # h1^T = tanh(W1 @ x^T + b1)  -> (H, TB); no in-kernel transpose needed.
    h1 = jnp.tanh(
        jnp.dot(w1_ref[...], xt_ref[...], preferred_element_type=jnp.float32) + b1
    )
    # h2^T = tanh(W2 @ h1^T + b2) -> (H, TB)
    h2 = jnp.tanh(
        jnp.dot(w2_ref[...], h1, preferred_element_type=jnp.float32) + b2
    )
    # value^T = w3 . h2^T + b3    -> (1, TB): VPU multiply + sublane reduce
    v = jnp.sum(w3 * h2, axis=0, keepdims=True) + b3_ref[0, 0]
    out_ref[...] = v.astype(out_ref.dtype)


def critic_forward(state, params, *, block_b=4096):
    """state: (B, state_dim) float32.
    params: PyTorch-layout weights: w1 (H,S), b1 (H,), w2 (H,H), b2 (H,),
            w3 (1,H), b3 (1,)."""
    w1 = params["w1"].astype(jnp.float32)
    b1 = params["b1"].astype(jnp.float32)
    w2 = params["w2"].astype(jnp.float32)
    b2 = params["b2"].astype(jnp.float32)
    w3 = params["w3"].astype(jnp.float32)
    b3 = params["b3"].astype(jnp.float32)

    state = state.astype(jnp.float32)
    B, S = state.shape
    H = w1.shape[0]

    # --- batch tiling --------------------------------------------------------
    # Pad to 128-row chunks first (lane-dense tiles), then split into a small
    # number of grid steps.  Padding waste <= TB - 128 instead of rounding the
    # whole batch up to a fixed big tile.
    block_b = max(128, _round_up(block_b, 128))
    n128 = max(1, pl.cdiv(B, 128))           # number of 128-row work chunks
    max_chunks = block_b // 128
    # >=2 grid steps when there is enough work so the "parallel" axis shards
    # across both TensorCores on v7x (no-op on single-TC v5e/v6e).
    n_steps = max(pl.cdiv(n128, max_chunks), 2 if n128 > 1 else 1)
    tb_chunks = pl.cdiv(n128, n_steps)
    TB = tb_chunks * 128
    G = pl.cdiv(n128, tb_chunks)
    B_pad = G * TB

    x = state
    if B_pad != B:
        x = jnp.pad(state, ((0, B_pad - B), (0, 0)))
    # Pre-transpose once in the wrapper: kernel tiles arrive lane-dense (S, TB),
    # no XLU relayout inside the kernel.
    xt = x.T                                  # (S, B_pad)

    aux = jnp.concatenate(
        [b1.reshape(H, 1), b2.reshape(H, 1), w3.reshape(H, 1)], axis=1
    )                                          # (H, 3) = [b1 | b2 | w3]
    b3s = b3.reshape(1, 1)

    out = pl.pallas_call(
        _critic_kernel,
        out_shape=jax.ShapeDtypeStruct((1, B_pad), jnp.float32),
        grid=(G,),
        in_specs=[
            pl.BlockSpec((S, TB), lambda i: (0, i)),            # state tile (transposed)
            pl.BlockSpec((H, S), lambda i: (0, 0)),             # w1 (resident)
            pl.BlockSpec((H, H), lambda i: (0, 0)),             # w2 (resident)
            pl.BlockSpec((H, 3), lambda i: (0, 0)),             # packed b1/b2/w3
            pl.BlockSpec(memory_space=pltpu.MemorySpace.SMEM),  # b3 scalar
        ],
        out_specs=pl.BlockSpec((1, TB), lambda i: (0, i)),
        compiler_params=pltpu.CompilerParams(
            dimension_semantics=("parallel",),
        ),
    )(xt, w1, w2, aux, b3s)

    # (1, B_pad) lane-dense slab -> (B, 1) column, drop padding rows.
    return out.reshape(B_pad, 1)[:B]


def init_critic_params(key, state_dim, hidden_dim=64):
    """nn.Linear-style init, PyTorch (out_features, in_features) weight layout."""
    k1, k2, k3, k4, k5, k6 = jax.random.split(key, 6)

    def lin_init(kw, kb, fan_in, fan_out):
        bound = 1.0 / jnp.sqrt(jnp.float32(fan_in))
        w = jax.random.uniform(kw, (fan_out, fan_in), jnp.float32, -bound, bound)
        b = jax.random.uniform(kb, (fan_out,), jnp.float32, -bound, bound)
        return w, b

    w1, b1 = lin_init(k1, k2, state_dim, hidden_dim)
    w2, b2 = lin_init(k3, k4, hidden_dim, hidden_dim)
    w3, b3 = lin_init(k5, k6, hidden_dim, 1)
    return {"w1": w1, "b1": b1, "w2": w2, "b2": b2, "w3": w3, "b3": b3}


def critic_reference(state, params):
    """Pure-JAX reference of the PyTorch forward (x @ W^T + b) for checking."""
    h1 = jnp.tanh(state @ params["w1"].T + params["b1"])
    h2 = jnp.tanh(h1 @ params["w2"].T + params["b2"])
    return h2 @ params["w3"].T + params["b3"]


if __name__ == "__main__":
    key = jax.random.PRNGKey(0)
    k_params, k_state1, k_state2 = jax.random.split(key, 3)

    batch = 8
    state_dim = 16
    hidden_dim = 64

    params = init_critic_params(k_params, state_dim, hidden_dim)

    # Small batch: single grid step.
    state = jax.random.normal(k_state1, (batch, state_dim), dtype=jnp.float32)
    value = jax.block_until_ready(critic_forward(state, params))
    ref = critic_reference(state, params)
    assert value.shape == (batch, 1)
    assert jnp.allclose(value, ref, atol=1e-5, rtol=1e-5)

    # Larger, awkward batch: exercises padding + multi-step (G >= 2) path.
    state2 = jax.random.normal(k_state2, (300, state_dim), dtype=jnp.float32)
    value2 = jax.block_until_ready(critic_forward(state2, params))
    ref2 = critic_reference(state2, params)
    assert value2.shape == (300, 1)
    assert jnp.allclose(value2, ref2, atol=1e-5, rtol=1e-5)

    print("KERNEL_OK")
</pallas_src>

<mosaic_0001>
module attributes {stable_mosaic.version = 11 : i64} {
  func.func @_critic_kernel(%arg0: i32, %arg1: memref<16x128xf32, #tpu.memory_space<vmem>>, %arg2: memref<64x16xf32, #tpu.memory_space<vmem>>, %arg3: memref<64x64xf32, #tpu.memory_space<vmem>>, %arg4: memref<64x3xf32, #tpu.memory_space<vmem>>, %arg5: memref<1x1xf32, #tpu.memory_space<smem>>, %arg6: memref<1x128xf32, #tpu.memory_space<vmem>>) attributes {dimension_semantics = [#tpu.dimension_semantics<parallel>], iteration_bounds = array<i64: 1>, scalar_prefetch = 0 : i64, scratch_operands = 0 : i64, tpu.core_type = #tpu.core_type<tc>, window_params = [{transform_indices = @transform_0, window_bounds = array<i64: 16, 128>}, {pipeline_mode = #tpu.pipeline_mode<synchronous>, transform_indices = @transform_1, window_bounds = array<i64: 64, 16>}, {pipeline_mode = #tpu.pipeline_mode<synchronous>, transform_indices = @transform_2, window_bounds = array<i64: 64, 64>}, {pipeline_mode = #tpu.pipeline_mode<synchronous>, transform_indices = @transform_3, window_bounds = array<i64: 64, 3>}, {transform_indices = @transform_4, window_bounds = array<i64: 1, 1>}, {transform_indices = @transform_5, window_bounds = array<i64: 1, 128>}]} {
    %c0 = arith.constant 0 : index
    %c0_0 = arith.constant 0 : index
    %0 = vector.load %arg4[%c0, %c0_0] : memref<64x3xf32, #tpu.memory_space<vmem>>, vector<64x1xf32>
    %c0_1 = arith.constant 0 : index
    %c1 = arith.constant 1 : index
    %1 = vector.load %arg4[%c0_1, %c1] : memref<64x3xf32, #tpu.memory_space<vmem>>, vector<64x1xf32>
    %c0_2 = arith.constant 0 : index
    %c2 = arith.constant 2 : index
    %2 = vector.load %arg4[%c0_2, %c2] : memref<64x3xf32, #tpu.memory_space<vmem>>, vector<64x1xf32>
    %c0_3 = arith.constant 0 : index
    %c0_4 = arith.constant 0 : index
    %3 = vector.load %arg2[%c0_3, %c0_4] : memref<64x16xf32, #tpu.memory_space<vmem>>, vector<64x16xf32>
    %c0_5 = arith.constant 0 : index
    %c0_6 = arith.constant 0 : index
    %4 = vector.load %arg1[%c0_5, %c0_6] : memref<16x128xf32, #tpu.memory_space<vmem>>, vector<16x128xf32>
    %cst = arith.constant dense<0.000000e+00> : vector<64x128xf32>
    %5 = tpu.matmul %3, %4, %cst {dimension_numbers = #tpu.dot_dimension_numbers<[1], [0], [0], [1], [0, 0, 1, 1], [], []>} : vector<64x16xf32>, vector<16x128xf32>, vector<64x128xf32> -> vector<64x128xf32>
    %6 = vector.broadcast %0 : vector<64x1xf32> to vector<64x128xf32>
    %7 = arith.addf %5, %6 : vector<64x128xf32>
    %8 = math.tanh %7 : vector<64x128xf32>
    %c0_7 = arith.constant 0 : index
    %c0_8 = arith.constant 0 : index
    %9 = vector.load %arg3[%c0_7, %c0_8] : memref<64x64xf32, #tpu.memory_space<vmem>>, vector<64x64xf32>
    %cst_9 = arith.constant dense<0.000000e+00> : vector<64x128xf32>
    %10 = tpu.matmul %9, %8, %cst_9 {dimension_numbers = #tpu.dot_dimension_numbers<[1], [0], [0], [1], [0, 0, 1, 1], [], []>} : vector<64x64xf32>, vector<64x128xf32>, vector<64x128xf32> -> vector<64x128xf32>
    %11 = vector.broadcast %1 : vector<64x1xf32> to vector<64x128xf32>
    %12 = arith.addf %10, %11 : vector<64x128xf32>
    %13 = math.tanh %12 : vector<64x128xf32>
    %14 = vector.broadcast %2 : vector<64x1xf32> to vector<64x128xf32>
    %15 = arith.mulf %14, %13 : vector<64x128xf32>
    %cst_10 = arith.constant dense<0.000000e+00> : vector<128xf32>
    %16 = vector.multi_reduction <add>, %15, %cst_10 [0] : vector<64x128xf32> to vector<128xf32>
    %17 = vector.shape_cast %16 : vector<128xf32> to vector<1x128xf32>
    %c0_11 = arith.constant 0 : index
    %c0_12 = arith.constant 0 : index
    %18 = memref.load %arg5[%c0_11, %c0_12] : memref<1x1xf32, #tpu.memory_space<smem>>
    %19 = vector.broadcast %18 : f32 to vector<1x128xf32>
    %20 = arith.addf %17, %19 : vector<1x128xf32>
    %c0_13 = arith.constant 0 : index
    %c0_14 = arith.constant 0 : index
    %21 = vector.load %arg6[%c0_13, %c0_14] : memref<1x128xf32, #tpu.memory_space<vmem>>, vector<1x128xf32>
    tpu.vector_store %arg6[%c0_13, %c0_14], %20 {strides = array<i32>} : memref<1x128xf32, #tpu.memory_space<vmem>>, vector<1x128xf32>,
    return
  }
  func.func @transform_0(%arg0: i32) -> (i32, i32) {
    %c0_i32 = arith.constant 0 : i32
    %c0_i32_0 = arith.constant 0 : i32
    return %c0_i32, %arg0 : i32, i32
  }
  func.func @transform_1(%arg0: i32) -> (i32, i32) {
    %c0_i32 = arith.constant 0 : i32
    %c0_i32_0 = arith.constant 0 : i32
    %c0_i32_1 = arith.constant 0 : i32
    return %c0_i32, %c0_i32_0 : i32, i32
  }
  func.func @transform_2(%arg0: i32) -> (i32, i32) {
    %c0_i32 = arith.constant 0 : i32
    %c0_i32_0 = arith.constant 0 : i32
    %c0_i32_1 = arith.constant 0 : i32
    return %c0_i32, %c0_i32_0 : i32, i32
  }
  func.func @transform_3(%arg0: i32) -> (i32, i32) {
    %c0_i32 = arith.constant 0 : i32
    %c0_i32_0 = arith.constant 0 : i32
    %c0_i32_1 = arith.constant 0 : i32
    return %c0_i32, %c0_i32_0 : i32, i32
  }
  func.func @transform_4(%arg0: i32) -> (i32, i32) {
    %c0_i32 = arith.constant 0 : i32
    %c0_i32_0 = arith.constant 0 : i32
    %c0_i32_1 = arith.constant 0 : i32
    return %c0_i32, %c0_i32_0 : i32, i32
  }
  func.func @transform_5(%arg0: i32) -> (i32, i32) {
    %c0_i32 = arith.constant 0 : i32
    %c0_i32_0 = arith.constant 0 : i32
    return %c0_i32, %arg0 : i32, i32
  }
}

</mosaic_0001>

<llo_original>
// kernel: tpu_custom_call.1
$region0: #{tpu_custom_call.1}
  #allocation0 [shape = 'u32[]', space=smem, size = 0x4, offset = 0x4, fixed_abs, tag = 'smem constant byte address 0x4 - core index']
  #allocation1 [shape = 'u32[144,128]{1,0:T(1,128)}', space=vmem, size = 0x12000, scoped, tag = 'internal scratch']
  #allocation2 [shape = 'f32[1,1]{1,0:T(1,128)S(6)}', space=smem, size = 0x200, scoped, tag = 'scoped memory for tpu_custom_call.1']
  %s0 = inlined_call_operand.vmem [shape: f32[16,128], index: 0, kind: input, shape index: {}]
  %s1 = inlined_call_operand.vmem [shape: f32[64,16], index: 1, kind: input, shape index: {}]
  %s2 = inlined_call_operand.vmem [shape: f32[64,64], index: 2, kind: input, shape index: {}]
  %s3 = inlined_call_operand.vmem [shape: f32[64,3], index: 3, kind: input, shape index: {}]
  %s4 = inlined_call_operand.<no memory space> [shape: f32[1,1], index: 4, kind: input, shape index: {}]
  %s5 = inlined_call_operand.hbm [shape: f32[1,128], index: 5, kind: output, shape index: {}]
  %s6 = sld [smem:[#allocation0]]
  $region30: #{tpu_custom_call.1} parent=0
    _
  %s8 = ssub.s32 1, %s6
  %s9 = scalar_select 0, %s8, %s6
  %10 = sst [smem:[#allocation2]] %s4
  $region1: #{tpu_custom_call.1} parent=0
    #allocation3 [shape = 'u8[512]{0}', space=vmem, size = 0x400, scoped, tag = 'output window, operand 0, single buffered']
    #allocation4 [shape = 's32[1]{0}', space=sflag, size = 0x4, scoped, tag = 'scoped memory for tpu_custom_call.1']
    %11 = vsyncpa [#allocation4], 0
    // Predicated region
    $region2: #{tpu_custom_call.1} parent=1 // pred_check
      _
    $region3: #{tpu_custom_call.1} parent=1 // pred_check_branch
      %13 = sbr.rel (0) target = $region5
    $region4: #{tpu_custom_call.1} parent=1 // pred_region
      _
    $region5: #{tpu_custom_call.1} parent=1 // pred_fallthru
      _
    // Predicated region
    $region6: #{tpu_custom_call.1} parent=1 // pred_check
      _
    $region7: #{tpu_custom_call.1} parent=1 // pred_check_branch
      %15 = sbr.rel (0) target = $region9
    $region8: #{tpu_custom_call.1} parent=1 // pred_region
      _
    $region9: #{tpu_custom_call.1} parent=1 // pred_fallthru
      _
    // Predicated region
    $region10: #{tpu_custom_call.1} parent=1 // pred_check
      _
    $region11: #{tpu_custom_call.1} parent=1 // pred_check_branch
      %17 = sbr.rel (0) target = $region13
    $region12: #{tpu_custom_call.1} parent=1 // pred_region
      _
    $region13: #{tpu_custom_call.1} parent=1 // pred_fallthru
      _
    // Predicated region
    $region14: #{tpu_custom_call.1} parent=1 // pred_check
      _
    $region15: #{tpu_custom_call.1} parent=1 // pred_check_branch
      %19 = sbr.rel (0) target = $region17
    $region16: #{tpu_custom_call.1} parent=1 // pred_region
      _
    $region17: #{tpu_custom_call.1} parent=1 // pred_fallthru
      _
    // Predicated region
    $region18: #{tpu_custom_call.1} parent=1 // pred_check
      _
    $region19: #{tpu_custom_call.1} parent=1 // pred_check_branch
      %21 = sbr.rel (0) target = $region21
    $region20: #{tpu_custom_call.1} parent=1 // pred_region
      _
    $region21: #{tpu_custom_call.1} parent=1 // pred_fallthru
      _
    %v22 = vld [vmem:[%s3] sm:$0xff]
    %v23 = vld [vmem:[%s3 + $0x8] sm:$0xff]
    %v24 = vld [vmem:[%s3 + $0x10] sm:$0xff]
    %v25 = vld [vmem:[%s3 + $0x18] sm:$0xff]
    %v26 = vld [vmem:[%s3 + $0x20] sm:$0xff]
    %v27 = vld [vmem:[%s3 + $0x28] sm:$0xff]
    %v28 = vld [vmem:[%s3 + $0x30] sm:$0xff]
    %v29 = vld [vmem:[%s3 + $0x38] sm:$0xff]
    %v30 = vld [vmem:[%s1] sm:$0xff]
    %v31 = vld [vmem:[%s1 + $0x8] sm:$0xff]
    %v32 = vld [vmem:[%s1 + $0x10] sm:$0xff]
    %v33 = vld [vmem:[%s1 + $0x18] sm:$0xff]
    %v34 = vld [vmem:[%s1 + $0x20] sm:$0xff]
    %v35 = vld [vmem:[%s1 + $0x28] sm:$0xff]
    %v36 = vld [vmem:[%s1 + $0x30] sm:$0xff]
    %v37 = vld [vmem:[%s1 + $0x38] sm:$0xff]
    %v38 = vld [vmem:[%s0] sm:$0xff]
    %v39 = vld [vmem:[%s0 + $0x8] sm:$0xff]
    %41 = vset.pattern.permute.xlu0 0
    %42 = vperm.xlu0 %41, %v22
    %v43 = vpop.permute.xlu0 %42
    %46 = vset.pattern.permute.xlu0 0
    %47 = vperm.xlu0 %46, %v23
    %v48 = vpop.permute.xlu0 %47
    %51 = vset.pattern.permute.xlu0 0
    %52 = vperm.xlu0 %51, %v24
    %v53 = vpop.permute.xlu0 %52
    %56 = vset.pattern.permute.xlu0 0
    %57 = vperm.xlu0 %56, %v25
    %v58 = vpop.permute.xlu0 %57
    %61 = vset.pattern.permute.xlu0 0
    %62 = vperm.xlu0 %61, %v26
    %v63 = vpop.permute.xlu0 %62
    %66 = vset.pattern.permute.xlu0 0
    %67 = vperm.xlu0 %66, %v27
    %v68 = vpop.permute.xlu0 %67
    %71 = vset.pattern.permute.xlu0 0
    %72 = vperm.xlu0 %71, %v28
    %v73 = vpop.permute.xlu0 %72
    %76 = vset.pattern.permute.xlu0 0
    %77 = vperm.xlu0 %76, %v29
    %v78 = vpop.permute.xlu0 %77
    %vm80 = vcmask 130048
    %v82 = vsel %vm80, %v30, 0
    %v85 = vsel %vm80, %v31, 0
    %v88 = vsel %vm80, %v32, 0
    %v91 = vsel %vm80, %v33, 0
    %v94 = vsel %vm80, %v34, 0
    %v97 = vsel %vm80, %v35, 0
    %v100 = vsel %vm80, %v36, 0
    %v103 = vsel %vm80, %v37, 0
    %105 = vmatprep.subr.mxu0 0.0
    %106 = vmatpush1.msra.mxu0 0.0
    %107 = vmatprep.subr.mxu0 0.0
    %108 = vmatpush1.msra.mxu0 0.0
    %109 = vmatprep.subr.mxu0 0.0
    %110 = vmatpush1.msra.mxu0 0.0
    %111 = vmatprep.subr.mxu0 0.0
    %112 = vmatpush1.msra.mxu0 0.0
    %113 = vmatprep.subr.mxu0 0.0
    %114 = vmatpush1.msra.mxu0 0.0
    %115 = vmatprep.subr.mxu0 0.0
    %116 = vmatpush1.msra.mxu0 0.0
    %117 = vmatprep.subr.mxu0 0.0
    %118 = vmatpush1.msra.mxu0 0.0
    %119 = vmatprep.subr.mxu0 0.0
    %120 = vmatpush1.msra.mxu0 0.0
    %121 = vmatprep.subr.mxu0 0.0
    %122 = vmatpush1.msra.mxu0 0.0
    %123 = vmatprep.subr.mxu0 0.0
    %124 = vmatpush1.msra.mxu0 0.0
    %125 = vmatprep.subr.mxu0 0.0
    %126 = vmatpush1.msra.mxu0 0.0
    %127 = vmatprep.subr.mxu0 0.0
    %128 = vmatpush1.msra.mxu0 0.0
    %129 = vmatprep.subr.mxu0 0.0
    %130 = vmatpush1.msra.mxu0 0.0
    %131 = vmatprep.subr.mxu0 0.0
    %132 = vmatpush1.msra.mxu0 0.0
    %133 = vmatprep.subr.mxu0 0.0
    %134 = vmatpush1.msra.mxu0 %v39
    %135 = vmatprep.subr.mxu0 0.0
    %136 = vmatpush1.msra.mxu0 %v38
    %137 = vmatprep.subr.mxu0 0.0
    %138 = vmatpush2.msra.mxu0 0.0
    %139 = vmatprep.subr.mxu0 0.0
    %140 = vmatpush2.msra.mxu0 0.0
    %141 = vmatprep.subr.mxu0 0.0
    %142 = vmatpush2.msra.mxu0 0.0
    %143 = vmatprep.subr.mxu0 0.0
    %144 = vmatpush2.msra.mxu0 0.0
    %145 = vmatprep.subr.mxu0 0.0
    %146 = vmatpush2.msra.mxu0 0.0
    %147 = vmatprep.subr.mxu0 0.0
    %148 = vmatpush2.msra.mxu0 0.0
    %149 = vmatprep.subr.mxu0 0.0
    %150 = vmatpush2.msra.mxu0 0.0
    %151 = vmatprep.subr.mxu0 0.0
    %152 = vmatpush2.msra.mxu0 0.0
    %153 = vmatprep.subr.mxu0 0.0
    %154 = vmatpush2.msra.mxu0 0.0
    %155 = vmatprep.subr.mxu0 0.0
    %156 = vmatpush2.msra.mxu0 0.0
    %157 = vmatprep.subr.mxu0 0.0
    %158 = vmatpush2.msra.mxu0 0.0
    %159 = vmatprep.subr.mxu0 0.0
    %160 = vmatpush2.msra.mxu0 0.0
    %161 = vmatprep.subr.mxu0 0.0
    %162 = vmatpush2.msra.mxu0 0.0
    %163 = vmatprep.subr.mxu0 0.0
    %164 = vmatpush2.msra.mxu0 0.0
    %165 = vmatprep.subr.mxu0 0.0
    %166 = vmatpush2.msra.mxu0 0.0
    %167 = vmatprep.subr.mxu0 0.0
    %168 = vmatpush2.msra.mxu0 0.0
    %169 = vmatprep.mubr.f32.mxu0 0.0
    %170 = vmatmul.mubr.f32.gmra.mxu0 %v82
    %v171 = vpop.f32.mrf.mxu0
    %v172 = vadd.f32 %v43, %v171
    %v173 = vpop.f32.mrf.mxu0
    %174 = vmatprep.mubr.f32.mxu0 0.0
    %175 = vmatmul.mubr.f32.gmra.mxu0 %v85
    %v176 = vpop.f32.mrf.mxu0
    %v177 = vadd.f32 %v48, %v176
    %v178 = vpop.f32.mrf.mxu0
    %179 = vmatprep.mubr.f32.mxu0 0.0
    %180 = vmatmul.mubr.f32.gmra.mxu0 %v88
    %v181 = vpop.f32.mrf.mxu0
    %v182 = vadd.f32 %v53, %v181
    %v183 = vpop.f32.mrf.mxu0
    %184 = vmatprep.mubr.f32.mxu0 0.0
    %185 = vmatmul.mubr.f32.gmra.mxu0 %v91
    %v186 = vpop.f32.mrf.mxu0
    %v187 = vadd.f32 %v58, %v186
    %v188 = vpop.f32.mrf.mxu0
    %189 = vmatprep.mubr.f32.mxu0 0.0
    %190 = vmatmul.mubr.f32.gmra.mxu0 %v94
    %v191 = vpop.f32.mrf.mxu0
    %v192 = vadd.f32 %v63, %v191
    %v193 = vpop.f32.mrf.mxu0
    %194 = vmatprep.mubr.f32.mxu0 0.0
    %195 = vmatmul.mubr.f32.gmra.mxu0 %v97
    %v196 = vpop.f32.mrf.mxu0
    %v197 = vadd.f32 %v68, %v196
    %v198 = vpop.f32.mrf.mxu0
    %199 = vmatprep.mubr.f32.mxu0 0.0
    %200 = vmatmul.mubr.f32.gmra.mxu0 %v100
    %v201 = vpop.f32.mrf.mxu0
    %v202 = vadd.f32 %v73, %v201
    %v203 = vpop.f32.mrf.mxu0
    %204 = vmatprep.mubr.f32.mxu0 0.0
    %205 = vmatmul.mubr.f32.gmra.mxu0 %v103
    %v206 = vpop.f32.mrf.mxu0
    %v207 = vadd.f32 %v78, %v206
    %v208 = vpop.f32.mrf.mxu0
    %209 = vdwg.mxu0
    %v210 = vtanh.pop %v172
    %v211 = vtanh.pop %v177
    %v212 = vtanh.pop %v182
    %v213 = vtanh.pop %v187
    %v214 = vtanh.pop %v192
    %v215 = vtanh.pop %v197
    %v216 = vtanh.pop %v202
    %v217 = vtanh.pop %v207
    %v218 = vld [vmem:[%s2] sm:$0xff]
    %v219 = vld [vmem:[%s2 + $0x8] sm:$0xff]
    %v220 = vld [vmem:[%s2 + $0x10] sm:$0xff]
    %v221 = vld [vmem:[%s2 + $0x18] sm:$0xff]
    %v222 = vld [vmem:[%s2 + $0x20] sm:$0xff]
    %v223 = vld [vmem:[%s2 + $0x28] sm:$0xff]
    %v224 = vld [vmem:[%s2 + $0x30] sm:$0xff]
    %v225 = vld [vmem:[%s2 + $0x38] sm:$0xff]
    %226 = vset.pattern.permute.xlu0 1
    %227 = vperm.xlu0 %226, %v22
    %v228 = vpop.permute.xlu0 %227
    %230 = vset.pattern.permute.xlu0 1
    %231 = vperm.xlu0 %230, %v23
    %v232 = vpop.permute.xlu0 %231
    %234 = vset.pattern.permute.xlu0 1
    %235 = vperm.xlu0 %234, %v24
    %v236 = vpop.permute.xlu0 %235
    %238 = vset.pattern.permute.xlu0 1
    %239 = vperm.xlu0 %238, %v25
    %v240 = vpop.permute.xlu0 %239
    %242 = vset.pattern.permute.xlu0 1
    %243 = vperm.xlu0 %242, %v26
    %v244 = vpop.permute.xlu0 %243
    %246 = vset.pattern.permute.xlu0 1
    %247 = vperm.xlu0 %246, %v27
    %v248 = vpop.permute.xlu0 %247
    %250 = vset.pattern.permute.xlu0 1
    %251 = vperm.xlu0 %250, %v28
    %v252 = vpop.permute.xlu0 %251
    %254 = vset.pattern.permute.xlu0 1
    %255 = vperm.xlu0 %254, %v29
    %v256 = vpop.permute.xlu0 %255
    %vm258 = vcmask 523264
    %v260 = vsel %vm258, %v218, 0
    %v263 = vsel %vm258, %v219, 0
    %v266 = vsel %vm258, %v220, 0
    %v269 = vsel %vm258, %v221, 0
    %v272 = vsel %vm258, %v222, 0
    %v275 = vsel %vm258, %v223, 0
    %v278 = vsel %vm258, %v224, 0
    %v281 = vsel %vm258, %v225, 0
    %283 = vmatprep.subr.mxu0 0.0
    %284 = vmatpush1.msra.mxu0 0.0
    %285 = vmatprep.subr.mxu0 0.0
    %286 = vmatpush1.msra.mxu0 0.0
    %287 = vmatprep.subr.mxu0 0.0
    %288 = vmatpush1.msra.mxu0 0.0
    %289 = vmatprep.subr.mxu0 0.0
    %290 = vmatpush1.msra.mxu0 0.0
    %291 = vmatprep.subr.mxu0 0.0
    %292 = vmatpush1.msra.mxu0 0.0
    %293 = vmatprep.subr.mxu0 0.0
    %294 = vmatpush1.msra.mxu0 0.0
    %295 = vmatprep.subr.mxu0 0.0
    %296 = vmatpush1.msra.mxu0 0.0
    %297 = vmatprep.subr.mxu0 0.0
    %298 = vmatpush1.msra.mxu0 0.0
    %299 = vmatprep.subr.mxu0 0.0
    %300 = vmatpush1.msra.mxu0 %v217
    %301 = vmatprep.subr.mxu0 0.0
    %302 = vmatpush1.msra.mxu0 %v216
    %303 = vmatprep.subr.mxu0 0.0
    %304 = vmatpush1.msra.mxu0 %v215
    %305 = vmatprep.subr.mxu0 0.0
    %306 = vmatpush1.msra.mxu0 %v214
    %307 = vmatprep.subr.mxu0 0.0
    %308 = vmatpush1.msra.mxu0 %v213
    %309 = vmatprep.subr.mxu0 0.0
    %310 = vmatpush1.msra.mxu0 %v212
    %311 = vmatprep.subr.mxu0 0.0
    %312 = vmatpush1.msra.mxu0 %v211
    %313 = vmatprep.subr.mxu0 0.0
    %314 = vmatpush1.msra.mxu0 %v210
    %315 = vmatprep.subr.mxu0 0.0
    %316 = vmatpush2.msra.mxu0 0.0
    %317 = vmatprep.subr.mxu0 0.0
    %318 = vmatpush2.msra.mxu0 0.0
    %319 = vmatprep.subr.mxu0 0.0
    %320 = vmatpush2.msra.mxu0 0.0
    %321 = vmatprep.subr.mxu0 0.0
    %322 = vmatpush2.msra.mxu0 0.0
    %323 = vmatprep.subr.mxu0 0.0
    %324 = vmatpush2.msra.mxu0 0.0
    %325 = vmatprep.subr.mxu0 0.0
    %326 = vmatpush2.msra.mxu0 0.0
    %327 = vmatprep.subr.mxu0 0.0
    %328 = vmatpush2.msra.mxu0 0.0
    %329 = vmatprep.subr.mxu0 0.0
    %330 = vmatpush2.msra.mxu0 0.0
    %331 = vmatprep.subr.mxu0 0.0
    %332 = vmatpush2.msra.mxu0 0.0
    %333 = vmatprep.subr.mxu0 0.0
    %334 = vmatpush2.msra.mxu0 0.0
    %335 = vmatprep.subr.mxu0 0.0
    %336 = vmatpush2.msra.mxu0 0.0
    %337 = vmatprep.subr.mxu0 0.0
    %338 = vmatpush2.msra.mxu0 0.0
    %339 = vmatprep.subr.mxu0 0.0
    %340 = vmatpush2.msra.mxu0 0.0
    %341 = vmatprep.subr.mxu0 0.0
    %342 = vmatpush2.msra.mxu0 0.0
    %343 = vmatprep.subr.mxu0 0.0
    %344 = vmatpush2.msra.mxu0 0.0
    %345 = vmatprep.subr.mxu0 0.0
    %346 = vmatpush2.msra.mxu0 0.0
    %347 = vmatprep.mubr.f32.mxu0 0.0
    %348 = vmatmul.mubr.f32.gmra.mxu0 %v260
    %v349 = vpop.f32.mrf.mxu0
    %v350 = vadd.f32 %v228, %v349
    %v351 = vpop.f32.mrf.mxu0
    %352 = vmatprep.mubr.f32.mxu0 0.0
    %353 = vmatmul.mubr.f32.gmra.mxu0 %v263
    %v354 = vpop.f32.mrf.mxu0
    %v355 = vadd.f32 %v232, %v354
    %v356 = vpop.f32.mrf.mxu0
    %357 = vmatprep.mubr.f32.mxu0 0.0
    %358 = vmatmul.mubr.f32.gmra.mxu0 %v266
    %v359 = vpop.f32.mrf.mxu0
    %v360 = vadd.f32 %v236, %v359
    %v361 = vpop.f32.mrf.mxu0
    %362 = vmatprep.mubr.f32.mxu0 0.0
    %363 = vmatmul.mubr.f32.gmra.mxu0 %v269
    %v364 = vpop.f32.mrf.mxu0
    %v365 = vadd.f32 %v240, %v364
    %v366 = vpop.f32.mrf.mxu0
    %367 = vmatprep.mubr.f32.mxu0 0.0
    %368 = vmatmul.mubr.f32.gmra.mxu0 %v272
    %v369 = vpop.f32.mrf.mxu0
    %v370 = vadd.f32 %v244, %v369
    %v371 = vpop.f32.mrf.mxu0
    %372 = vmatprep.mubr.f32.mxu0 0.0
    %373 = vmatmul.mubr.f32.gmra.mxu0 %v275
    %v374 = vpop.f32.mrf.mxu0
    %v375 = vadd.f32 %v248, %v374
    %v376 = vpop.f32.mrf.mxu0
    %377 = vmatprep.mubr.f32.mxu0 0.0
    %378 = vmatmul.mubr.f32.gmra.mxu0 %v278
    %v379 = vpop.f32.mrf.mxu0
    %v380 = vadd.f32 %v252, %v379
    %v381 = vpop.f32.mrf.mxu0
    %382 = vmatprep.mubr.f32.mxu0 0.0
    %383 = vmatmul.mubr.f32.gmra.mxu0 %v281
    %v384 = vpop.f32.mrf.mxu0
    %v385 = vadd.f32 %v256, %v384
    %v386 = vpop.f32.mrf.mxu0
    %387 = vdwg.mxu0
    %v388 = vtanh.pop %v350
    %v389 = vtanh.pop %v355
    %v390 = vtanh.pop %v360
    %v391 = vtanh.pop %v365
    %v392 = vtanh.pop %v370
    %v393 = vtanh.pop %v375
    %v394 = vtanh.pop %v380
    %v395 = vtanh.pop %v385
    %396 = vset.pattern.permute.xlu0 2
    %397 = vperm.xlu0 %396, %v22
    %v398 = vpop.permute.xlu0 %397
    %400 = vset.pattern.permute.xlu0 2
    %401 = vperm.xlu0 %400, %v23
    %v402 = vpop.permute.xlu0 %401
    %404 = vset.pattern.permute.xlu0 2
    %405 = vperm.xlu0 %404, %v24
    %v406 = vpop.permute.xlu0 %405
    %408 = vset.pattern.permute.xlu0 2
    %409 = vperm.xlu0 %408, %v25
    %v410 = vpop.permute.xlu0 %409
    %412 = vset.pattern.permute.xlu0 2
    %413 = vperm.xlu0 %412, %v26
    %v414 = vpop.permute.xlu0 %413
    %416 = vset.pattern.permute.xlu0 2
    %417 = vperm.xlu0 %416, %v27
    %v418 = vpop.permute.xlu0 %417
    %420 = vset.pattern.permute.xlu0 2
    %421 = vperm.xlu0 %420, %v28
    %v422 = vpop.permute.xlu0 %421
    %424 = vset.pattern.permute.xlu0 2
    %425 = vperm.xlu0 %424, %v29
    %v426 = vpop.permute.xlu0 %425
    %v428 = vmul.f32 %v398, %v388
    %v429 = vmul.f32 %v402, %v389
    %v430 = vmul.f32 %v406, %v390
    %v431 = vmul.f32 %v410, %v391
    %v432 = vmul.f32 %v414, %v392
    %v433 = vmul.f32 %v418, %v393
    %v434 = vmul.f32 %v422, %v394
    %v435 = vmul.f32 %v426, %v395
    %v436 = vadd.f32 %v428, %v429
    %v437 = vadd.f32 %v436, %v430
    %v438 = vadd.f32 %v437, %v431
    %v439 = vadd.f32 %v438, %v432
    %v440 = vadd.f32 %v439, %v433
    %v441 = vadd.f32 %v440, %v434
    %v442 = vadd.f32 %v441, %v435
    %v443 = vrot.slane %v442, 4
    %v444 = vadd.f32 %v442, %v443
    %v445 = vrot.slane %v444, 2
    %v446 = vadd.f32 %v444, %v445
    %v447 = vrot.slane %v446, 1
    %v448 = vadd.f32 %v446, %v447
    %s449 = sld [smem:[#allocation2]]
    %v450 = vstv %s449
    %v451 = vadd.f32 %v448, %v450
    %452 = vst [vmem:[#allocation3] sm:$0x1] %v451
    // Predicated region
    $region22: #{tpu_custom_call.1} parent=1 // pred_check
      _
    $region23: #{tpu_custom_call.1} parent=1 // pred_check_branch
      %454 = sbr.rel (0) target = $region25
    $region24: #{tpu_custom_call.1} parent=1 // pred_region
      %s456 = ssub.s32 16, 16
      %457 = vsyncadd [#allocation4], %s456
      %s459 = sshll.u32 [#allocation3], 4
      %s460 = int_to_ptr.vmem [resolvable:$true] %s459
      %462 = dma.vmem_to_hbm [thread:$0]  %s460, 16, %s5, [#allocation4]
    $region25: #{tpu_custom_call.1} parent=1 // pred_fallthru
      _
    // Predicated region
    $region26: #{tpu_custom_call.1} parent=1 // pred_check
      _
    $region27: #{tpu_custom_call.1} parent=1 // pred_check_branch
      %464 = sbr.rel (0) target = $region29
    $region28: #{tpu_custom_call.1} parent=1 // pred_region
      %465 = dma.done [#allocation4], 16
    $region29: #{tpu_custom_call.1} parent=1 // pred_fallthru
      _
    %466 = vsyncpa [#allocation4], 1

</llo_original>
